<compile_context>
chip_gen: v5e
topology: v5e:2x2
jax: 0.10.0
libtpu: 0.0.40
codegen_flags: <defaults>
</compile_context>

<pallas_src>
import jax
import jax.numpy as jnp
from jax.experimental import pallas as pl
from jax.experimental.pallas import tpu as pltpu

LN_EPS = 1e-5          # PyTorch nn.LayerNorm default
TM_TARGET = 1024       # target rows per tile (big tiles amortize grid-step overhead)
TM_FLOOR = 256         # never shrink rows below a full MXU pass; tile D_out instead
LANE = 128
SUBLANE = 8


def _round_up(a, b):
    return (a + b - 1) // b * b


def _cdiv(a, b):
    return -(-a // b)


def _vmem_budget():
    """(planning budget, compiler vmem_limit_bytes) from the chip's real VMEM."""
    try:
        info = pltpu.get_tpu_info()
        cap = int(getattr(info, "vmem_capacity_bytes", 0)) or (64 << 20)
    except Exception:
        cap = 64 << 20                      # conservative fallback (v7x: 64 MiB / TC)
    budget = (cap * 7) // 10                # ~89 MiB on v5e/v6e, ~44 MiB on v7x
    limit = max(budget, min(cap - (16 << 20), (cap * 17) // 20))
    return budget, limit


def _plan(M, D_in, d_out_p, x_isz, out_isz, mm_isz):
    """Pick (TM, TN, grid, padded sizes, vmem_limit) under the VMEM budget."""
    budget, vmem_limit = _vmem_budget()
    m_pad8 = max(SUBLANE, _round_up(M, SUBLANE))

    def footprint(tm, tn, nj):
        w_bufs = 1 if nj == 1 else 2                                   # resident W -> 1 buf
        resident = 2 * D_in * 4 + w_bufs * (D_in * tn * mm_isz + tn * 4)
        tiles = 2 * tm * (D_in * x_isz + tn * out_isz)                 # double-buffered x/out
        interm = tm * D_in * (3 * 4 + mm_isz) + 2 * tm * tn * 4        # f32 temps + xn scratch
        return resident + tiles + interm

    # 1) Widest output tile possible; halve TN (multiples of 128) until at
    #    least a TM_FLOOR-row tile fits (D_out tiling instead of TM collapse).
    tn = d_out_p
    while tn > LANE and footprint(min(TM_FLOOR, m_pad8), tn,
                                  1 if tn >= d_out_p else 2) > budget:
        tn = max(LANE, _round_up(tn // 2, LANE))
    nj = _cdiv(d_out_p, tn)
    d_out_pp = nj * tn

    # 2) Grow TM as large as the budget allows (capped by target / row count).
    tm = max(SUBLANE, min(TM_TARGET, m_pad8) // SUBLANE * SUBLANE)
    while tm > TM_FLOOR and footprint(tm, tn, nj) > budget:
        tm = max(TM_FLOOR, (tm // 2) // SUBLANE * SUBLANE)
    while tm > SUBLANE and footprint(tm, tn, nj) > budget:             # last resort
        tm = max(SUBLANE, (tm // 2) // SUBLANE * SUBLANE)

    m_pad = _round_up(m_pad8, tm)
    ni = m_pad // tm

    # 3) v7x megacore: with enough work, make sure there are >= 2 row tiles so
    #    the "parallel" axis can actually shard across both TensorCores.
    if ni == 1 and nj == 1 and m_pad8 >= 2 * TM_FLOOR:
        tm = max(TM_FLOOR, _round_up(_cdiv(m_pad8, 2), SUBLANE))
        m_pad = _round_up(m_pad8, tm)
        ni = m_pad // tm

    return tm, tn, ni, nj, m_pad, d_out_pp, vmem_limit


def pooler_kernel(x_ref, gamma_ref, beta_ref, w_ref, b_ref, o_ref, xn_ref):
    # Grid = (row tiles i, D_out tiles j).  LayerNorm runs once per row tile
    # (j == 0) into the xn_ref scratch and is reused for every column tile.
    @pl.when(pl.program_id(1) == 0)
    def _():
        x = x_ref[...].astype(jnp.float32)
        inv_d = 1.0 / x.shape[-1]
        mean = jnp.sum(x, axis=-1, keepdims=True) * inv_d
        xc = x - mean                                # two-pass LN: matches torch numerics
        var = jnp.sum(xc * xc, axis=-1, keepdims=True) * inv_d
        xn = xc * jax.lax.rsqrt(var + LN_EPS)
        xn = xn * gamma_ref[...] + beta_ref[...]
        xn_ref[...] = xn.astype(xn_ref.dtype)

    # Dense on the MXU (bf16 operands when activations are bf16; f32 accumulate).
    y = jnp.dot(xn_ref[...], w_ref[...], preferred_element_type=jnp.float32)
    y = y + b_ref[...]
    # TODO(synk): on v6e/v7x with bf16 outputs, a bf16 tanh doubles EUP rate;
    #             only worth it if the EUP slot ever shows on the critical path.
    o_ref[...] = jnp.tanh(y).astype(o_ref.dtype)


def pooler_forward(x, gamma, beta, w, b):
    """x: (B, S, D_in), w: (D_in, D_out) -> tanh(LayerNorm(x) @ w + b)."""
    B, S, D_in = x.shape
    D_out = w.shape[1]
    M = B * S

    out_dtype = x.dtype
    # Precision contract: MXU operand dtype follows the activations (bf16 in ->
    # bf16 matmul with f32 accumulation); LN stats / rsqrt / bias stay in f32.
    mm_dtype = jnp.bfloat16 if x.dtype == jnp.bfloat16 else jnp.float32

    x_isz = jnp.dtype(x.dtype).itemsize
    out_isz = jnp.dtype(out_dtype).itemsize
    mm_isz = jnp.dtype(mm_dtype).itemsize

    d_out_p = _round_up(D_out, LANE)           # lane-dense (unmasked) output stores
    tm, tn, ni, nj, m_pad, d_out_pp, vmem_limit = _plan(
        M, D_in, d_out_p, x_isz, out_isz, mm_isz)

    # One-time (hoisted) parameter prep -- never inside the per-tile body.
    gamma2 = gamma.reshape(1, D_in).astype(jnp.float32)
    beta2 = beta.reshape(1, D_in).astype(jnp.float32)
    w_mm = w.astype(mm_dtype)
    b2 = b.reshape(1, D_out).astype(jnp.float32)
    if d_out_pp != D_out:
        w_mm = jnp.pad(w_mm, ((0, 0), (0, d_out_pp - D_out)))
        b2 = jnp.pad(b2, ((0, 0), (0, d_out_pp - D_out)))

    x2 = x.reshape(M, D_in)
    if m_pad != M:
        x2 = jnp.pad(x2, ((0, m_pad - M), (0, 0)))   # zero rows are LN/tanh-safe

    cost = pl.CostEstimate(
        flops=2 * m_pad * D_in * d_out_pp + 10 * m_pad * D_in,
        transcendentals=m_pad * (d_out_pp + 1),      # tanh per output + rsqrt per row
        bytes_accessed=(m_pad * D_in * x_isz
                        + m_pad * d_out_pp * out_isz
                        + (ni if nj > 1 else 1) * D_in * d_out_pp * mm_isz
                        + (2 * D_in + d_out_pp) * 4),
    )

    def build(single_buffer_resident):
        def spec(shape, imap, resident):
            if resident and single_buffer_resident and hasattr(pl, "Buffered"):
                return pl.BlockSpec(shape, imap, pipeline_mode=pl.Buffered(1))
            return pl.BlockSpec(shape, imap)

        return pl.pallas_call(
            pooler_kernel,
            out_shape=jax.ShapeDtypeStruct((m_pad, d_out_pp), out_dtype),
            grid_spec=pltpu.PrefetchScalarGridSpec(
                num_scalar_prefetch=0,
                grid=(ni, nj),
                in_specs=[
                    pl.BlockSpec((tm, D_in), lambda i, j: (i, 0)),      # x tile (2-buf)
                    spec((1, D_in), lambda i, j: (0, 0), True),         # gamma (resident)
                    spec((1, D_in), lambda i, j: (0, 0), True),         # beta  (resident)
                    spec((D_in, tn), lambda i, j: (0, j), nj == 1),     # W
                    spec((1, tn), lambda i, j: (0, j), nj == 1),        # bias
                ],
                out_specs=pl.BlockSpec((tm, tn), lambda i, j: (i, j)),
                scratch_shapes=[pltpu.VMEM((tm, D_in), mm_dtype)],      # xn reuse across j
            ),
            compiler_params=pltpu.CompilerParams(
                dimension_semantics=("parallel", "arbitrary"),
                vmem_limit_bytes=int(vmem_limit),
            ),
            cost_estimate=cost,
        )(x2, gamma2, beta2, w_mm, b2)

    try:
        out = build(True)
    except Exception:
        # Fallback: default double-buffering for the resident params.
        out = build(False)

    return out[:M, :D_out].reshape(B, S, D_out)


def pooler_ref(x, gamma, beta, w, b):
    """Pure-JAX reference (two-pass LayerNorm, f32)."""
    xf = x.astype(jnp.float32)
    mean = jnp.mean(xf, axis=-1, keepdims=True)
    var = jnp.mean((xf - mean) ** 2, axis=-1, keepdims=True)
    xn = (xf - mean) * jax.lax.rsqrt(var + LN_EPS)
    xn = xn * gamma + beta
    return jnp.tanh(xn @ w.astype(jnp.float32) + b).astype(x.dtype)


if __name__ == "__main__":
    # Small shapes consistent with the module's forward:
    # batch=2, seq=8, input_features=32, output_features=32
    B, S, D_in, D_out = 2, 8, 32, 32

    key = jax.random.PRNGKey(0)
    kx, kw, kb = jax.random.split(key, 3)

    x = jax.random.normal(kx, (B, S, D_in), dtype=jnp.float32)

    # Deterministic synthetic parameters (PyTorch-style init):
    gamma = jnp.ones((D_in,), dtype=jnp.float32)     # LayerNorm weight
    beta = jnp.zeros((D_in,), dtype=jnp.float32)     # LayerNorm bias
    bound = 1.0 / (D_in ** 0.5)
    # Stored as (D_in, D_out) so y = x @ w + b matches PyTorch's x @ W^T + b.
    w = jax.random.uniform(kw, (D_in, D_out), dtype=jnp.float32,
                           minval=-bound, maxval=bound)
    b = jax.random.uniform(kb, (D_out,), dtype=jnp.float32,
                           minval=-bound, maxval=bound)

    out = jax.block_until_ready(pooler_forward(x, gamma, beta, w, b))
    ref = pooler_ref(x, gamma, beta, w, b)

    assert out.shape == (B, S, D_out)
    assert jnp.allclose(out, ref, atol=1e-4, rtol=1e-4), "mismatch vs reference"

    print("KERNEL_OK")
</pallas_src>

<mosaic_0001>
module attributes {stable_mosaic.version = 11 : i64} {
  func.func @pooler_kernel(%arg0: i32, %arg1: i32, %arg2: memref<16x32xf32, #tpu.memory_space<vmem>>, %arg3: memref<1x32xf32, #tpu.memory_space<vmem>>, %arg4: memref<1x32xf32, #tpu.memory_space<vmem>>, %arg5: memref<32x128xf32, #tpu.memory_space<vmem>>, %arg6: memref<1x128xf32, #tpu.memory_space<vmem>>, %arg7: memref<16x128xf32, #tpu.memory_space<vmem>>, %arg8: memref<16x32xf32, #tpu.memory_space<vmem>>) attributes {dimension_semantics = [#tpu.dimension_semantics<parallel>, #tpu.dimension_semantics<arbitrary>], iteration_bounds = array<i64: 1, 1>, scalar_prefetch = 0 : i64, scratch_operands = 1 : i64, tpu.core_type = #tpu.core_type<tc>, window_params = [{transform_indices = @transform_0, window_bounds = array<i64: 16, 32>}, {pipeline_mode = #tpu.pipeline_mode<synchronous>, transform_indices = @transform_1, window_bounds = array<i64: 1, 32>}, {pipeline_mode = #tpu.pipeline_mode<synchronous>, transform_indices = @transform_2, window_bounds = array<i64: 1, 32>}, {pipeline_mode = #tpu.pipeline_mode<synchronous>, transform_indices = @transform_3, window_bounds = array<i64: 32, 128>}, {pipeline_mode = #tpu.pipeline_mode<synchronous>, transform_indices = @transform_4, window_bounds = array<i64: 1, 128>}, {transform_indices = @transform_5, window_bounds = array<i64: 16, 128>}]} {
    %c0_i32 = arith.constant 0 : i32
    %0 = arith.cmpi eq, %arg1, %c0_i32 : i32
    %1 = arith.extui %0 : i1 to i32
    %c0_i32_0 = arith.constant 0 : i32
    %2 = arith.cmpi ne, %1, %c0_i32_0 : i32
    scf.if %2 {
      %c0_8 = arith.constant 0 : index
      %c0_9 = arith.constant 0 : index
      %11 = vector.load %arg2[%c0_8, %c0_9] : memref<16x32xf32, #tpu.memory_space<vmem>>, vector<16x32xf32>
      %cst_10 = arith.constant dense<0.000000e+00> : vector<16xf32>
      %12 = vector.multi_reduction <add>, %11, %cst_10 [1] : vector<16x32xf32> to vector<16xf32>
      %13 = vector.shape_cast %12 : vector<16xf32> to vector<16x1xf32>
      %cst_11 = arith.constant 3.125000e-02 : f32
      %14 = vector.broadcast %cst_11 : f32 to vector<16x1xf32>
      %15 = arith.mulf %13, %14 : vector<16x1xf32>
      %16 = vector.broadcast %15 : vector<16x1xf32> to vector<16x32xf32>
      %17 = arith.subf %11, %16 : vector<16x32xf32>
      %18 = arith.mulf %17, %17 : vector<16x32xf32>
      %cst_12 = arith.constant dense<0.000000e+00> : vector<16xf32>
      %19 = vector.multi_reduction <add>, %18, %cst_12 [1] : vector<16x32xf32> to vector<16xf32>
      %20 = vector.shape_cast %19 : vector<16xf32> to vector<16x1xf32>
      %cst_13 = arith.constant 3.125000e-02 : f32
      %21 = vector.broadcast %cst_13 : f32 to vector<16x1xf32>
      %22 = arith.mulf %20, %21 : vector<16x1xf32>
      %cst_14 = arith.constant 9.99999974E-6 : f32
      %23 = vector.broadcast %cst_14 : f32 to vector<16x1xf32>
      %24 = arith.addf %22, %23 : vector<16x1xf32>
      %25 = math.rsqrt %24 : vector<16x1xf32>
      %26 = vector.broadcast %25 : vector<16x1xf32> to vector<16x32xf32>
      %27 = arith.mulf %17, %26 : vector<16x32xf32>
      %c0_15 = arith.constant 0 : index
      %c0_16 = arith.constant 0 : index
      %28 = vector.load %arg3[%c0_15, %c0_16] : memref<1x32xf32, #tpu.memory_space<vmem>>, vector<1x32xf32>
      %29 = vector.broadcast %28 : vector<1x32xf32> to vector<16x32xf32>
      %30 = arith.mulf %27, %29 : vector<16x32xf32>
      %c0_17 = arith.constant 0 : index
      %c0_18 = arith.constant 0 : index
      %31 = vector.load %arg4[%c0_17, %c0_18] : memref<1x32xf32, #tpu.memory_space<vmem>>, vector<1x32xf32>
      %32 = vector.broadcast %31 : vector<1x32xf32> to vector<16x32xf32>
      %33 = arith.addf %30, %32 : vector<16x32xf32>
      %c0_19 = arith.constant 0 : index
      %c0_20 = arith.constant 0 : index
      %34 = vector.load %arg8[%c0_19, %c0_20] : memref<16x32xf32, #tpu.memory_space<vmem>>, vector<16x32xf32>
      tpu.vector_store %arg8[%c0_19, %c0_20], %33 {strides = array<i32>} : memref<16x32xf32, #tpu.memory_space<vmem>>, vector<16x32xf32>,
    } else {
    }
    %c0 = arith.constant 0 : index
    %c0_1 = arith.constant 0 : index
    %3 = vector.load %arg8[%c0, %c0_1] : memref<16x32xf32, #tpu.memory_space<vmem>>, vector<16x32xf32>
    %c0_2 = arith.constant 0 : index
    %c0_3 = arith.constant 0 : index
    %4 = vector.load %arg5[%c0_2, %c0_3] : memref<32x128xf32, #tpu.memory_space<vmem>>, vector<32x128xf32>
    %cst = arith.constant dense<0.000000e+00> : vector<16x128xf32>
    %5 = tpu.matmul %3, %4, %cst {dimension_numbers = #tpu.dot_dimension_numbers<[1], [0], [0], [1], [0, 0, 1, 1], [], []>} : vector<16x32xf32>, vector<32x128xf32>, vector<16x128xf32> -> vector<16x128xf32>
    %c0_4 = arith.constant 0 : index
    %c0_5 = arith.constant 0 : index
    %6 = vector.load %arg6[%c0_4, %c0_5] : memref<1x128xf32, #tpu.memory_space<vmem>>, vector<1x128xf32>
    %7 = vector.broadcast %6 : vector<1x128xf32> to vector<16x128xf32>
    %8 = arith.addf %5, %7 : vector<16x128xf32>
    %9 = math.tanh %8 : vector<16x128xf32>
    %c0_6 = arith.constant 0 : index
    %c0_7 = arith.constant 0 : index
    %10 = vector.load %arg7[%c0_6, %c0_7] : memref<16x128xf32, #tpu.memory_space<vmem>>, vector<16x128xf32>
    tpu.vector_store %arg7[%c0_6, %c0_7], %9 {strides = array<i32>} : memref<16x128xf32, #tpu.memory_space<vmem>>, vector<16x128xf32>,
    return
  }
  func.func @transform_0(%arg0: i32, %arg1: i32) -> (i32, i32) {
    %c0_i32 = arith.constant 0 : i32
    %c0_i32_0 = arith.constant 0 : i32
    return %arg0, %c0_i32 : i32, i32
  }
  func.func @transform_1(%arg0: i32, %arg1: i32) -> (i32, i32) {
    %c0_i32 = arith.constant 0 : i32
    %c0_i32_0 = arith.constant 0 : i32
    %c0_i32_1 = arith.constant 0 : i32
    return %c0_i32, %c0_i32_0 : i32, i32
  }
  func.func @transform_2(%arg0: i32, %arg1: i32) -> (i32, i32) {
    %c0_i32 = arith.constant 0 : i32
    %c0_i32_0 = arith.constant 0 : i32
    %c0_i32_1 = arith.constant 0 : i32
    return %c0_i32, %c0_i32_0 : i32, i32
  }
  func.func @transform_3(%arg0: i32, %arg1: i32) -> (i32, i32) {
    %c0_i32 = arith.constant 0 : i32
    %c0_i32_0 = arith.constant 0 : i32
    return %c0_i32, %arg1 : i32, i32
  }
  func.func @transform_4(%arg0: i32, %arg1: i32) -> (i32, i32) {
    %c0_i32 = arith.constant 0 : i32
    %c0_i32_0 = arith.constant 0 : i32
    return %c0_i32, %arg1 : i32, i32
  }
  func.func @transform_5(%arg0: i32, %arg1: i32) -> (i32, i32) {
    %c0_i32 = arith.constant 0 : i32
    return %arg0, %arg1 : i32, i32
  }
}

module attributes {stable_mosaic.version = 11 : i64} {
  func.func @pooler_kernel(%arg0: i32, %arg1: i32, %arg2: memref<16x32xf32, #tpu.memory_space<vmem>>, %arg3: memref<1x32xf32, #tpu.memory_space<vmem>>, %arg4: memref<1x32xf32, #tpu.memory_space<vmem>>, %arg5: memref<32x128xf32, #tpu.memory_space<vmem>>, %arg6: memref<1x128xf32, #tpu.memory_space<vmem>>, %arg7: memref<16x128xf32, #tpu.memory_space<vmem>>, %arg8: memref<16x32xf32, #tpu.memory_space<vmem>>) attributes {dimension_semantics = [#tpu.dimension_semantics<parallel>, #tpu.dimension_semantics<arbitrary>], iteration_bounds = array<i64: 1, 1>, scalar_prefetch = 0 : i64, scratch_operands = 1 : i64, tpu.core_type = #tpu.core_type<tc>, window_params = [{transform_indices = @transform_0, window_bounds = array<i64: 16, 32>}, {pipeline_mode = #tpu.pipeline_mode<synchronous>, transform_indices = @transform_1, window_bounds = array<i64: 1, 32>}, {pipeline_mode = #tpu.pipeline_mode<synchronous>, transform_indices = @transform_2, window_bounds = array<i64: 1, 32>}, {transform_indices = @transform_3, window_bounds = array<i64: 32, 128>}, {transform_indices = @transform_4, window_bounds = array<i64: 1, 128>}, {transform_indices = @transform_5, window_bounds = array<i64: 16, 128>}]} {
    %c0_i32 = arith.constant 0 : i32
    %0 = arith.cmpi eq, %arg1, %c0_i32 : i32
    %1 = arith.extui %0 : i1 to i32
    %c0_i32_0 = arith.constant 0 : i32
    %2 = arith.cmpi ne, %1, %c0_i32_0 : i32
    scf.if %2 {
      %c0_8 = arith.constant 0 : index
      %c0_9 = arith.constant 0 : index
      %11 = vector.load %arg2[%c0_8, %c0_9] : memref<16x32xf32, #tpu.memory_space<vmem>>, vector<16x32xf32>
      %cst_10 = arith.constant dense<0.000000e+00> : vector<16xf32>
      %12 = vector.multi_reduction <add>, %11, %cst_10 [1] : vector<16x32xf32> to vector<16xf32>
      %13 = vector.shape_cast %12 : vector<16xf32> to vector<16x1xf32>
      %cst_11 = arith.constant 3.125000e-02 : f32
      %14 = vector.broadcast %cst_11 : f32 to vector<16x1xf32>
      %15 = arith.mulf %13, %14 : vector<16x1xf32>
      %16 = vector.broadcast %15 : vector<16x1xf32> to vector<16x32xf32>
      %17 = arith.subf %11, %16 : vector<16x32xf32>
      %18 = arith.mulf %17, %17 : vector<16x32xf32>
      %cst_12 = arith.constant dense<0.000000e+00> : vector<16xf32>
      %19 = vector.multi_reduction <add>, %18, %cst_12 [1] : vector<16x32xf32> to vector<16xf32>
      %20 = vector.shape_cast %19 : vector<16xf32> to vector<16x1xf32>
      %cst_13 = arith.constant 3.125000e-02 : f32
      %21 = vector.broadcast %cst_13 : f32 to vector<16x1xf32>
      %22 = arith.mulf %20, %21 : vector<16x1xf32>
      %cst_14 = arith.constant 9.99999974E-6 : f32
      %23 = vector.broadcast %cst_14 : f32 to vector<16x1xf32>
      %24 = arith.addf %22, %23 : vector<16x1xf32>
      %25 = math.rsqrt %24 : vector<16x1xf32>
      %26 = vector.broadcast %25 : vector<16x1xf32> to vector<16x32xf32>
      %27 = arith.mulf %17, %26 : vector<16x32xf32>
      %c0_15 = arith.constant 0 : index
      %c0_16 = arith.constant 0 : index
      %28 = vector.load %arg3[%c0_15, %c0_16] : memref<1x32xf32, #tpu.memory_space<vmem>>, vector<1x32xf32>
      %29 = vector.broadcast %28 : vector<1x32xf32> to vector<16x32xf32>
      %30 = arith.mulf %27, %29 : vector<16x32xf32>
      %c0_17 = arith.constant 0 : index
      %c0_18 = arith.constant 0 : index
      %31 = vector.load %arg4[%c0_17, %c0_18] : memref<1x32xf32, #tpu.memory_space<vmem>>, vector<1x32xf32>
      %32 = vector.broadcast %31 : vector<1x32xf32> to vector<16x32xf32>
      %33 = arith.addf %30, %32 : vector<16x32xf32>
      %c0_19 = arith.constant 0 : index
      %c0_20 = arith.constant 0 : index
      %34 = vector.load %arg8[%c0_19, %c0_20] : memref<16x32xf32, #tpu.memory_space<vmem>>, vector<16x32xf32>
      tpu.vector_store %arg8[%c0_19, %c0_20], %33 {strides = array<i32>} : memref<16x32xf32, #tpu.memory_space<vmem>>, vector<16x32xf32>,
    } else {
    }
    %c0 = arith.constant 0 : index
    %c0_1 = arith.constant 0 : index
    %3 = vector.load %arg8[%c0, %c0_1] : memref<16x32xf32, #tpu.memory_space<vmem>>, vector<16x32xf32>
    %c0_2 = arith.constant 0 : index
    %c0_3 = arith.constant 0 : index
    %4 = vector.load %arg5[%c0_2, %c0_3] : memref<32x128xf32, #tpu.memory_space<vmem>>, vector<32x128xf32>
    %cst = arith.constant dense<0.000000e+00> : vector<16x128xf32>
    %5 = tpu.matmul %3, %4, %cst {dimension_numbers = #tpu.dot_dimension_numbers<[1], [0], [0], [1], [0, 0, 1, 1], [], []>} : vector<16x32xf32>, vector<32x128xf32>, vector<16x128xf32> -> vector<16x128xf32>
    %c0_4 = arith.constant 0 : index
    %c0_5 = arith.constant 0 : index
    %6 = vector.load %arg6[%c0_4, %c0_5] : memref<1x128xf32, #tpu.memory_space<vmem>>, vector<1x128xf32>
    %7 = vector.broadcast %6 : vector<1x128xf32> to vector<16x128xf32>
    %8 = arith.addf %5, %7 : vector<16x128xf32>
    %9 = math.tanh %8 : vector<16x128xf32>
    %c0_6 = arith.constant 0 : index
    %c0_7 = arith.constant 0 : index
    %10 = vector.load %arg7[%c0_6, %c0_7] : memref<16x128xf32, #tpu.memory_space<vmem>>, vector<16x128xf32>
    tpu.vector_store %arg7[%c0_6, %c0_7], %9 {strides = array<i32>} : memref<16x128xf32, #tpu.memory_space<vmem>>, vector<16x128xf32>,
    return
  }
  func.func @transform_0(%arg0: i32, %arg1: i32) -> (i32, i32) {
    %c0_i32 = arith.constant 0 : i32
    %c0_i32_0 = arith.constant 0 : i32
    return %arg0, %c0_i32 : i32, i32
  }
  func.func @transform_1(%arg0: i32, %arg1: i32) -> (i32, i32) {
    %c0_i32 = arith.constant 0 : i32
    %c0_i32_0 = arith.constant 0 : i32
    %c0_i32_1 = arith.constant 0 : i32
    return %c0_i32, %c0_i32_0 : i32, i32
  }
  func.func @transform_2(%arg0: i32, %arg1: i32) -> (i32, i32) {
    %c0_i32 = arith.constant 0 : i32
    %c0_i32_0 = arith.constant 0 : i32
    %c0_i32_1 = arith.constant 0 : i32
    return %c0_i32, %c0_i32_0 : i32, i32
  }
  func.func @transform_3(%arg0: i32, %arg1: i32) -> (i32, i32) {
    %c0_i32 = arith.constant 0 : i32
    %c0_i32_0 = arith.constant 0 : i32
    return %c0_i32, %arg1 : i32, i32
  }
  func.func @transform_4(%arg0: i32, %arg1: i32) -> (i32, i32) {
    %c0_i32 = arith.constant 0 : i32
    %c0_i32_0 = arith.constant 0 : i32
    return %c0_i32, %arg1 : i32, i32
  }
  func.func @transform_5(%arg0: i32, %arg1: i32) -> (i32, i32) {
    %c0_i32 = arith.constant 0 : i32
    return %arg0, %arg1 : i32, i32
  }
}

</mosaic_0001>

<llo_original>
// kernel: tpu_custom_call.1
$region0: #{tpu_custom_call.1}
  #allocation0 [shape = 'u32[]', space=smem, size = 0x4, offset = 0x4, fixed_abs, tag = 'smem constant byte address 0x4 - core index']
  #allocation1 [shape = 'u32[72,128]{1,0:T(1,128)}', space=vmem, size = 0x9000, scoped, tag = 'internal scratch']
  #allocation2 [shape = 'f32[16,32]{1,0:T(8,128)}', space=vmem, size = 0x2000, scoped, tag = 'scratch operand']
  %s0 = inlined_call_operand.hbm [shape: f32[16,32], index: 0, kind: input, shape index: {}]
  %s1 = inlined_call_operand.hbm [shape: f32[1,32], index: 1, kind: input, shape index: {}]
  %s2 = inlined_call_operand.vmem [shape: f32[1,32], index: 2, kind: input, shape index: {}]
  %s3 = inlined_call_operand.hbm [shape: f32[32,128], index: 3, kind: input, shape index: {}]
  %s4 = inlined_call_operand.vmem [shape: f32[1,128], index: 4, kind: input, shape index: {}]
  %s5 = inlined_call_operand.hbm [shape: f32[16,128], index: 5, kind: output, shape index: {}]
  %s6 = sld [smem:[#allocation0]]
  $region46: #{tpu_custom_call.1} parent=0
    _
  %s8 = ssub.s32 1, %s6
  %s9 = scalar_select 0, %s8, %s6
  $region1: #{tpu_custom_call.1} parent=0
    #allocation3 [shape = 'u8[8192]{0}', space=vmem, size = 0x2000, scoped, tag = 'input window, operand 0, single buffered']
    #allocation4 [shape = 's32[1]{0}', space=sflag, size = 0x4, scoped, tag = 'scoped memory for tpu_custom_call.1']
    #allocation5 [shape = 's32[1]{0}', space=sflag, size = 0x4, scoped, tag = 'scoped memory for tpu_custom_call.1']
    #allocation6 [shape = 'u8[512]{0}', space=vmem, size = 0x400, scoped, tag = 'input window, operand 1, single buffered']
    #allocation7 [shape = 's32[1]{0}', space=sflag, size = 0x4, scoped, tag = 'scoped memory for tpu_custom_call.1']
    #allocation8 [shape = 'u8[16384]{0}', space=vmem, size = 0x4000, scoped, tag = 'input window, operand 3, single buffered']
    #allocation9 [shape = 'u8[8192]{0}', space=vmem, size = 0x2000, scoped, tag = 'output window, operand 0, single buffered']
    %10 = vsyncpa [#allocation4], 0
    %11 = vsyncpa [#allocation7], 0
    %12 = vsyncpa [#allocation5], 0
    // Predicated region
    $region2: #{tpu_custom_call.1} parent=1 // pred_check
      _
    $region3: #{tpu_custom_call.1} parent=1 // pred_check_branch
      %14 = sbr.rel (0) target = $region5
    $region4: #{tpu_custom_call.1} parent=1 // pred_region
      %16 = vsyncadd [#allocation4], 0
      %s17 = sshll.u32 %s0, 4
      %s18 = int_to_ptr.hbm [resolvable:$true] %s17
      %s19 = sshll.u32 [#allocation3], 4
      %s20 = int_to_ptr.vmem [resolvable:$true] %s19
      %25 = dma.hbm_to_vmem [thread:$0]  %s18, 256, %s20, [#allocation4], 128, 128, 8
    $region5: #{tpu_custom_call.1} parent=1 // pred_fallthru
      _
    // Predicated region
    $region6: #{tpu_custom_call.1} parent=1 // pred_check
      _
    $region7: #{tpu_custom_call.1} parent=1 // pred_check_branch
      %27 = sbr.rel (0) target = $region9
    $region8: #{tpu_custom_call.1} parent=1 // pred_region
      %29 = vsyncadd [#allocation7], 0
      %s31 = sshll.u32 %s1, 4
      %s32 = int_to_ptr.hbm [resolvable:$true] %s31
      %s33 = sshll.u32 [#allocation6], 4
      %s34 = int_to_ptr.vmem [resolvable:$true] %s33
      %36 = dma.hbm_to_vmem [thread:$0]  %s32, 16, %s34, [#allocation7]
    $region9: #{tpu_custom_call.1} parent=1 // pred_fallthru
      _
    // Predicated region
    $region10: #{tpu_custom_call.1} parent=1 // pred_check
      _
    $region11: #{tpu_custom_call.1} parent=1 // pred_check_branch
      %38 = sbr.rel (0) target = $region13
    $region12: #{tpu_custom_call.1} parent=1 // pred_region
      _
    $region13: #{tpu_custom_call.1} parent=1 // pred_fallthru
      _
    // Predicated region
    $region14: #{tpu_custom_call.1} parent=1 // pred_check
      _
    $region15: #{tpu_custom_call.1} parent=1 // pred_check_branch
      %40 = sbr.rel (0) target = $region17
    $region16: #{tpu_custom_call.1} parent=1 // pred_region
      %42 = vsyncadd [#allocation7], 0
      %s43 = sshll.u32 %s3, 4
      %s44 = int_to_ptr.hbm [resolvable:$true] %s43
      %s45 = sshll.u32 [#allocation8], 4
      %s46 = int_to_ptr.vmem [resolvable:$true] %s45
      %51 = dma.hbm_to_vmem [thread:$0]  %s44, 512, %s46, [#allocation7], 128, 128, 8
    $region17: #{tpu_custom_call.1} parent=1 // pred_fallthru
      _
    // Predicated region
    $region18: #{tpu_custom_call.1} parent=1 // pred_check
      _
    $region19: #{tpu_custom_call.1} parent=1 // pred_check_branch
      %53 = sbr.rel (0) target = $region21
    $region20: #{tpu_custom_call.1} parent=1 // pred_region
      _
    $region21: #{tpu_custom_call.1} parent=1 // pred_fallthru
      _
    // Predicated region
    $region22: #{tpu_custom_call.1} parent=1 // pred_check
      _
    $region23: #{tpu_custom_call.1} parent=1 // pred_check_branch
      %55 = sbr.rel (0) target = $region25
    $region24: #{tpu_custom_call.1} parent=1 // pred_region
      %57 = dma.done [#allocation4], 256
    $region25: #{tpu_custom_call.1} parent=1 // pred_fallthru
      _
    // Predicated region
    $region26: #{tpu_custom_call.1} parent=1 // pred_check
      _
    $region27: #{tpu_custom_call.1} parent=1 // pred_check_branch
      %59 = sbr.rel (0) target = $region29
    $region28: #{tpu_custom_call.1} parent=1 // pred_region
      %61 = dma.done [#allocation7], 16
    $region29: #{tpu_custom_call.1} parent=1 // pred_fallthru
      _
    // Predicated region
    $region30: #{tpu_custom_call.1} parent=1 // pred_check
      _
    $region31: #{tpu_custom_call.1} parent=1 // pred_check_branch
      %63 = sbr.rel (0) target = $region33
    $region32: #{tpu_custom_call.1} parent=1 // pred_region
      %65 = dma.done [#allocation7], 512
    $region33: #{tpu_custom_call.1} parent=1 // pred_fallthru
      _
    %p66 = scmp.eq.s32.totalorder 0, 0
    // Predicated region
    $region34: #{tpu_custom_call.1} parent=1 // pred_check
      %p67 = pneg %p66
    $region35: #{tpu_custom_call.1} parent=1 // pred_check_branch
      %69 = sbr.rel (%p67) target = $region37
    $region36: #{tpu_custom_call.1} parent=1 // pred_region
      %v70 = vld [vmem:[#allocation3] sm:$0xff]
      %v71 = vld [vmem:[#allocation3 + $0x8] sm:$0xff]
      %vm72 = vcmask 261120
      %v73 = vsel %vm72, %v70, 0.0
      %74 = vadd.xlane.f32.xlu0 %v73
      %v75 = vpop.xlane.xlu0 %74
      %v76 = vsel %vm72, %v71, 0.0
      %77 = vadd.xlane.f32.xlu0 %v76
      %v78 = vpop.xlane.xlu0 %77
      %v79 = vmul.f32 %v75, 0.03125
      %v80 = vmul.f32 %v78, 0.03125
      %v81 = vsub.f32 %v70, %v79
      %v82 = vsub.f32 %v71, %v80
      %v83 = vmul.f32 %v81, %v81
      %v84 = vmul.f32 %v82, %v82
      %v85 = vsel %vm72, %v83, 0.0
      %86 = vadd.xlane.f32.xlu0 %v85
      %v87 = vpop.xlane.xlu0 %86
      %v88 = vsel %vm72, %v84, 0.0
      %89 = vadd.xlane.f32.xlu0 %v88
      %v90 = vpop.xlane.xlu0 %89
      %v91 = vmul.f32 %v87, 0.03125
      %v92 = vmul.f32 %v90, 0.03125
      %v93 = vadd.f32 %v91, 1e-05
      %v94 = vadd.f32 %v92, 1e-05
      %v95 = vrsqrt.pop %v93
      %v96 = vmul.f32 %v95, %v93
      %v97 = vmul.f32 %v96, %v95
      %v98 = vmul.f32 0.5, %v97
      %v99 = vsub.f32 1.5, %v98
      %v100 = vmul.f32 %v95, %v99
      %vm101 = vweird.f32 %v93
      %vm102 = vweird.f32 %v95
      %vm103 = vmor %vm101, %vm102
      %v104 = vsel %vm103, %v95, %v100
      %v105 = vrsqrt.pop %v94
      %v106 = vmul.f32 %v105, %v94
      %v107 = vmul.f32 %v106, %v105
      %v108 = vmul.f32 0.5, %v107
      %v109 = vsub.f32 1.5, %v108
      %v110 = vmul.f32 %v105, %v109
      %vm111 = vweird.f32 %v94
      %vm112 = vweird.f32 %v105
      %vm113 = vmor %vm111, %vm112
      %v114 = vsel %vm113, %v105, %v110
      %v115 = vmul.f32 %v81, %v104
      %v116 = vmul.f32 %v82, %v114
      %v117 = vld [vmem:[#allocation6] sm:$0x1]
      %v119 = vperm.slane %v117, 0
      %v121 = vmul.f32 %v115, %v119
      %v122 = vmul.f32 %v116, %v119
      %v123 = vld [vmem:[%s2] sm:$0x1]
      %v125 = vperm.slane %v123, 0
      %v127 = vadd.f32 %v121, %v125
      %v128 = vadd.f32 %v122, %v125
      %129 = vst.msk [vmem:[#allocation2] sm:$0xff] %vm72, %v127
      %130 = vst.msk [vmem:[#allocation2 + $0x8] sm:$0xff] %vm72, %v128
    $region37: #{tpu_custom_call.1} parent=1 // pred_fallthru
      _
    %v131 = vld [vmem:[#allocation2] sm:$0xff]
    %v132 = vld [vmem:[#allocation2 + $0x8] sm:$0xff]
    %v133 = vld [vmem:[#allocation8] sm:$0xff]
    %v134 = vld [vmem:[#allocation8 + $0x8] sm:$0xff]
    %v135 = vld [vmem:[#allocation8 + $0x10] sm:$0xff]
    %v136 = vld [vmem:[#allocation8 + $0x18] sm:$0xff]
    %v137 = vld [vmem:[%s4] sm:$0x1]
    %v139 = vperm.slane %v137, 0
    %vm141 = vcmask 261120
    %v143 = vsel %vm141, %v131, 0
    %v146 = vsel %vm141, %v132, 0
    %148 = vmatpush.msra.mxu0 0.0
    %149 = vmatpush.msra.mxu0 0.0
    %150 = vmatpush.msra.mxu0 0.0
    %151 = vmatpush.msra.mxu0 0.0
    %152 = vmatpush.msra.mxu0 0.0
    %153 = vmatpush.msra.mxu0 0.0
    %154 = vmatpush.msra.mxu0 0.0
    %155 = vmatpush.msra.mxu0 0.0
    %156 = vmatpush.msra.mxu0 0.0
    %157 = vmatpush.msra.mxu0 0.0
    %158 = vmatpush.msra.mxu0 0.0
    %159 = vmatpush.msra.mxu0 0.0
    %160 = vmatpush.msra.mxu0 %v136
    %161 = vmatpush.msra.mxu0 %v135
    %162 = vmatpush.msra.mxu0 %v134
    %163 = vmatpush.msra.mxu0 %v133
    %164 = vmatmul.f32.gmra.mxu0 %v143
    %v165 = vpop.f32.mrf.mxu0
    %v166 = vadd.f32 %v139, %v165
    %167 = vmatmul.f32.gmra.mxu0 %v146
    %v168 = vpop.f32.mrf.mxu0
    %v169 = vadd.f32 %v139, %v168
    %170 = vdwg.mxu0
    %v171 = vtanh.pop %v166
    %v172 = vtanh.pop %v169
    %173 = vst [vmem:[#allocation9] sm:$0xff] %v171
    %174 = vst [vmem:[#allocation9 + $0x8] sm:$0xff] %v172
    // Predicated region
    $region38: #{tpu_custom_call.1} parent=1 // pred_check
      _
    $region39: #{tpu_custom_call.1} parent=1 // pred_check_branch
      %176 = sbr.rel (0) target = $region41
    $region40: #{tpu_custom_call.1} parent=1 // pred_region
      %178 = vsyncadd [#allocation5], 0
      %s179 = sshll.u32 [#allocation9], 4
      %s180 = int_to_ptr.vmem [resolvable:$true] %s179
      %s181 = sshll.u32 %s5, 4
      %s182 = int_to_ptr.hbm [resolvable:$true] %s181
      %187 = dma.vmem_to_hbm [thread:$0]  %s180, 256, %s182, [#allocation5], 128, 128, 8
    $region41: #{tpu_custom_call.1} parent=1 // pred_fallthru
      _
    // Predicated region
    $region42: #{tpu_custom_call.1} parent=1 // pred_check
      _
    $region43: #{tpu_custom_call.1} parent=1 // pred_check_branch
      %189 = sbr.rel (0) target = $region45
    $region44: #{tpu_custom_call.1} parent=1 // pred_region
      %191 = dma.done [#allocation5], 256
    $region45: #{tpu_custom_call.1} parent=1 // pred_fallthru
      _
    %192 = vsyncpa [#allocation4], 1
    %193 = vsyncpa [#allocation7], 1
    %194 = vsyncpa [#allocation5], 1

// kernel: tpu_custom_call.1
$region0: #{tpu_custom_call.1}
  #allocation0 [shape = 'u32[]', space=smem, size = 0x4, offset = 0x4, fixed_abs, tag = 'smem constant byte address 0x4 - core index']
  #allocation1 [shape = 'u32[72,128]{1,0:T(1,128)}', space=vmem, size = 0x9000, scoped, tag = 'internal scratch']
  #allocation2 [shape = 'f32[16,32]{1,0:T(8,128)}', space=vmem, size = 0x2000, scoped, tag = 'scratch operand']
  %s0 = inlined_call_operand.hbm [shape: f32[16,32], index: 0, kind: input, shape index: {}]
  %s1 = inlined_call_operand.hbm [shape: f32[1,32], index: 1, kind: input, shape index: {}]
  %s2 = inlined_call_operand.vmem [shape: f32[1,32], index: 2, kind: input, shape index: {}]
  %s3 = inlined_call_operand.hbm [shape: f32[32,128], index: 3, kind: input, shape index: {}]
  %s4 = inlined_call_operand.vmem [shape: f32[1,128], index: 4, kind: input, shape index: {}]
  %s5 = inlined_call_operand.hbm [shape: f32[16,128], index: 5, kind: output, shape index: {}]
  %s6 = sld [smem:[#allocation0]]
  $region46: #{tpu_custom_call.1} parent=0
    _
  %s8 = ssub.s32 1, %s6
  %s9 = scalar_select 0, %s8, %s6
  $region1: #{tpu_custom_call.1} parent=0
    #allocation3 [shape = 'u8[8192]{0}', space=vmem, size = 0x2000, scoped, tag = 'input window, operand 0, single buffered']
    #allocation4 [shape = 's32[1]{0}', space=sflag, size = 0x4, scoped, tag = 'scoped memory for tpu_custom_call.1']
    #allocation5 [shape = 's32[1]{0}', space=sflag, size = 0x4, scoped, tag = 'scoped memory for tpu_custom_call.1']
    #allocation6 [shape = 'u8[512]{0}', space=vmem, size = 0x400, scoped, tag = 'input window, operand 1, single buffered']
    #allocation7 [shape = 's32[1]{0}', space=sflag, size = 0x4, scoped, tag = 'scoped memory for tpu_custom_call.1']
    #allocation8 [shape = 'u8[16384]{0}', space=vmem, size = 0x4000, scoped, tag = 'input window, operand 3, single buffered']
    #allocation9 [shape = 'u8[8192]{0}', space=vmem, size = 0x2000, scoped, tag = 'output window, operand 0, single buffered']
    %10 = vsyncpa [#allocation4], 0
    %11 = vsyncpa [#allocation7], 0
    %12 = vsyncpa [#allocation5], 0
    // Predicated region
    $region2: #{tpu_custom_call.1} parent=1 // pred_check
      _
    $region3: #{tpu_custom_call.1} parent=1 // pred_check_branch
      %14 = sbr.rel (0) target = $region5
    $region4: #{tpu_custom_call.1} parent=1 // pred_region
      %16 = vsyncadd [#allocation4], 0
      %s17 = sshll.u32 %s0, 4
      %s18 = int_to_ptr.hbm [resolvable:$true] %s17
      %s19 = sshll.u32 [#allocation3], 4
      %s20 = int_to_ptr.vmem [resolvable:$true] %s19
      %25 = dma.hbm_to_vmem [thread:$0]  %s18, 256, %s20, [#allocation4], 128, 128, 8
    $region5: #{tpu_custom_call.1} parent=1 // pred_fallthru
      _
    // Predicated region
    $region6: #{tpu_custom_call.1} parent=1 // pred_check
      _
    $region7: #{tpu_custom_call.1} parent=1 // pred_check_branch
      %27 = sbr.rel (0) target = $region9
    $region8: #{tpu_custom_call.1} parent=1 // pred_region
      %29 = vsyncadd [#allocation7], 0
      %s31 = sshll.u32 %s1, 4
      %s32 = int_to_ptr.hbm [resolvable:$true] %s31
      %s33 = sshll.u32 [#allocation6], 4
      %s34 = int_to_ptr.vmem [resolvable:$true] %s33
      %36 = dma.hbm_to_vmem [thread:$0]  %s32, 16, %s34, [#allocation7]
    $region9: #{tpu_custom_call.1} parent=1 // pred_fallthru
      _
    // Predicated region
    $region10: #{tpu_custom_call.1} parent=1 // pred_check
      _
    $region11: #{tpu_custom_call.1} parent=1 // pred_check_branch
      %38 = sbr.rel (0) target = $region13
    $region12: #{tpu_custom_call.1} parent=1 // pred_region
      _
    $region13: #{tpu_custom_call.1} parent=1 // pred_fallthru
      _
    // Predicated region
    $region14: #{tpu_custom_call.1} parent=1 // pred_check
      _
    $region15: #{tpu_custom_call.1} parent=1 // pred_check_branch
      %40 = sbr.rel (0) target = $region17
    $region16: #{tpu_custom_call.1} parent=1 // pred_region
      %42 = vsyncadd [#allocation7], 0
      %s43 = sshll.u32 %s3, 4
      %s44 = int_to_ptr.hbm [resolvable:$true] %s43
      %s45 = sshll.u32 [#allocation8], 4
      %s46 = int_to_ptr.vmem [resolvable:$true] %s45
      %51 = dma.hbm_to_vmem [thread:$0]  %s44, 512, %s46, [#allocation7], 128, 128, 8
    $region17: #{tpu_custom_call.1} parent=1 // pred_fallthru
      _
    // Predicated region
    $region18: #{tpu_custom_call.1} parent=1 // pred_check
      _
    $region19: #{tpu_custom_call.1} parent=1 // pred_check_branch
      %53 = sbr.rel (0) target = $region21
    $region20: #{tpu_custom_call.1} parent=1 // pred_region
      _
    $region21: #{tpu_custom_call.1} parent=1 // pred_fallthru
      _
    // Predicated region
    $region22: #{tpu_custom_call.1} parent=1 // pred_check
      _
    $region23: #{tpu_custom_call.1} parent=1 // pred_check_branch
      %55 = sbr.rel (0) target = $region25
    $region24: #{tpu_custom_call.1} parent=1 // pred_region
      %57 = dma.done [#allocation4], 256
    $region25: #{tpu_custom_call.1} parent=1 // pred_fallthru
      _
    // Predicated region
    $region26: #{tpu_custom_call.1} parent=1 // pred_check
      _
    $region27: #{tpu_custom_call.1} parent=1 // pred_check_branch
      %59 = sbr.rel (0) target = $region29
    $region28: #{tpu_custom_call.1} parent=1 // pred_region
      %61 = dma.done [#allocation7], 16
    $region29: #{tpu_custom_call.1} parent=1 // pred_fallthru
      _
    // Predicated region
    $region30: #{tpu_custom_call.1} parent=1 // pred_check
      _
    $region31: #{tpu_custom_call.1} parent=1 // pred_check_branch
      %63 = sbr.rel (0) target = $region33
    $region32: #{tpu_custom_call.1} parent=1 // pred_region
      %65 = dma.done [#allocation7], 512
    $region33: #{tpu_custom_call.1} parent=1 // pred_fallthru
      _
    %p66 = scmp.eq.s32.totalorder 0, 0
    // Predicated region
    $region34: #{tpu_custom_call.1} parent=1 // pred_check
      %p67 = pneg %p66
    $region35: #{tpu_custom_call.1} parent=1 // pred_check_branch
      %69 = sbr.rel (%p67) target = $region37
    $region36: #{tpu_custom_call.1} parent=1 // pred_region
      %v70 = vld [vmem:[#allocation3] sm:$0xff]
      %v71 = vld [vmem:[#allocation3 + $0x8] sm:$0xff]
      %vm72 = vcmask 261120
      %v73 = vsel %vm72, %v70, 0.0
      %74 = vadd.xlane.f32.xlu0 %v73
      %v75 = vpop.xlane.xlu0 %74
      %v76 = vsel %vm72, %v71, 0.0
      %77 = vadd.xlane.f32.xlu0 %v76
      %v78 = vpop.xlane.xlu0 %77
      %v79 = vmul.f32 %v75, 0.03125
      %v80 = vmul.f32 %v78, 0.03125
      %v81 = vsub.f32 %v70, %v79
      %v82 = vsub.f32 %v71, %v80
      %v83 = vmul.f32 %v81, %v81
      %v84 = vmul.f32 %v82, %v82
      %v85 = vsel %vm72, %v83, 0.0
      %86 = vadd.xlane.f32.xlu0 %v85
      %v87 = vpop.xlane.xlu0 %86
      %v88 = vsel %vm72, %v84, 0.0
      %89 = vadd.xlane.f32.xlu0 %v88
      %v90 = vpop.xlane.xlu0 %89
      %v91 = vmul.f32 %v87, 0.03125
      %v92 = vmul.f32 %v90, 0.03125
      %v93 = vadd.f32 %v91, 1e-05
      %v94 = vadd.f32 %v92, 1e-05
      %v95 = vrsqrt.pop %v93
      %v96 = vmul.f32 %v95, %v93
      %v97 = vmul.f32 %v96, %v95
      %v98 = vmul.f32 0.5, %v97
      %v99 = vsub.f32 1.5, %v98
      %v100 = vmul.f32 %v95, %v99
      %vm101 = vweird.f32 %v93
      %vm102 = vweird.f32 %v95
      %vm103 = vmor %vm101, %vm102
      %v104 = vsel %vm103, %v95, %v100
      %v105 = vrsqrt.pop %v94
      %v106 = vmul.f32 %v105, %v94
      %v107 = vmul.f32 %v106, %v105
      %v108 = vmul.f32 0.5, %v107
      %v109 = vsub.f32 1.5, %v108
      %v110 = vmul.f32 %v105, %v109
      %vm111 = vweird.f32 %v94
      %vm112 = vweird.f32 %v105
      %vm113 = vmor %vm111, %vm112
      %v114 = vsel %vm113, %v105, %v110
      %v115 = vmul.f32 %v81, %v104
      %v116 = vmul.f32 %v82, %v114
      %v117 = vld [vmem:[#allocation6] sm:$0x1]
      %v119 = vperm.slane %v117, 0
      %v121 = vmul.f32 %v115, %v119
      %v122 = vmul.f32 %v116, %v119
      %v123 = vld [vmem:[%s2] sm:$0x1]
      %v125 = vperm.slane %v123, 0
      %v127 = vadd.f32 %v121, %v125
      %v128 = vadd.f32 %v122, %v125
      %129 = vst.msk [vmem:[#allocation2] sm:$0xff] %vm72, %v127
      %130 = vst.msk [vmem:[#allocation2 + $0x8] sm:$0xff] %vm72, %v128
    $region37: #{tpu_custom_call.1} parent=1 // pred_fallthru
      _
    %v131 = vld [vmem:[#allocation2] sm:$0xff]
    %v132 = vld [vmem:[#allocation2 + $0x8] sm:$0xff]
    %v133 = vld [vmem:[#allocation8] sm:$0xff]
    %v134 = vld [vmem:[#allocation8 + $0x8] sm:$0xff]
    %v135 = vld [vmem:[#allocation8 + $0x10] sm:$0xff]
    %v136 = vld [vmem:[#allocation8 + $0x18] sm:$0xff]
    %v137 = vld [vmem:[%s4] sm:$0x1]
    %v139 = vperm.slane %v137, 0
    %vm141 = vcmask 261120
    %v143 = vsel %vm141, %v131, 0
    %v146 = vsel %vm141, %v132, 0
    %148 = vmatpush.msra.mxu0 0.0
    %149 = vmatpush.msra.mxu0 0.0
    %150 = vmatpush.msra.mxu0 0.0
    %151 = vmatpush.msra.mxu0 0.0
    %152 = vmatpush.msra.mxu0 0.0
    %153 = vmatpush.msra.mxu0 0.0
    %154 = vmatpush.msra.mxu0 0.0
    %155 = vmatpush.msra.mxu0 0.0
    %156 = vmatpush.msra.mxu0 0.0
    %157 = vmatpush.msra.mxu0 0.0
    %158 = vmatpush.msra.mxu0 0.0
    %159 = vmatpush.msra.mxu0 0.0
    %160 = vmatpush.msra.mxu0 %v136
    %161 = vmatpush.msra.mxu0 %v135
    %162 = vmatpush.msra.mxu0 %v134
    %163 = vmatpush.msra.mxu0 %v133
    %164 = vmatmul.f32.gmra.mxu0 %v143
    %v165 = vpop.f32.mrf.mxu0
    %v166 = vadd.f32 %v139, %v165
    %167 = vmatmul.f32.gmra.mxu0 %v146
    %v168 = vpop.f32.mrf.mxu0
    %v169 = vadd.f32 %v139, %v168
    %170 = vdwg.mxu0
    %v171 = vtanh.pop %v166
    %v172 = vtanh.pop %v169
    %173 = vst [vmem:[#allocation9] sm:$0xff] %v171
    %174 = vst [vmem:[#allocation9 + $0x8] sm:$0xff] %v172
    // Predicated region
    $region38: #{tpu_custom_call.1} parent=1 // pred_check
      _
    $region39: #{tpu_custom_call.1} parent=1 // pred_check_branch
      %176 = sbr.rel (0) target = $region41
    $region40: #{tpu_custom_call.1} parent=1 // pred_region
      %178 = vsyncadd [#allocation5], 0
      %s179 = sshll.u32 [#allocation9], 4
      %s180 = int_to_ptr.vmem [resolvable:$true] %s179
      %s181 = sshll.u32 %s5, 4
      %s182 = int_to_ptr.hbm [resolvable:$true] %s181
      %187 = dma.vmem_to_hbm [thread:$0]  %s180, 256, %s182, [#allocation5], 128, 128, 8
    $region41: #{tpu_custom_call.1} parent=1 // pred_fallthru
      _
    // Predicated region
    $region42: #{tpu_custom_call.1} parent=1 // pred_check
      _
    $region43: #{tpu_custom_call.1} parent=1 // pred_check_branch
      %189 = sbr.rel (0) target = $region45
    $region44: #{tpu_custom_call.1} parent=1 // pred_region
      %191 = dma.done [#allocation5], 256
    $region45: #{tpu_custom_call.1} parent=1 // pred_fallthru
      _
    %192 = vsyncpa [#allocation4], 1
    %193 = vsyncpa [#allocation7], 1
    %194 = vsyncpa [#allocation5], 1

</llo_original>
